<compile_context>
chip_gen: v6e
topology: v6e:2x2x1
jax: 0.10.0
libtpu: 0.0.40
codegen_flags: <defaults>
</compile_context>

<pallas_src>
import jax
import jax.numpy as jnp
from jax.experimental import pallas as pl
from jax.experimental.pallas import tpu as pltpu


# ----------------------------- Pallas kernel --------------------------------
def _critic_kernel(y_ref, x_ref, w1x_ref, w1emb_ref, w2_ref, w3_ref, b3_ref,
                   o_ref):
    """Feature-major (batch-on-lanes) Critic forward for one batch tile.

    y_ref     [1,  TB] int32  labels, batch on the lane axis
    x_ref     [I,  TB] cdt    inputs, feature-major
    w1x_ref   [H0, I ] cdt    first-layer weight, x slice (PyTorch layout)
    w1emb_ref [H0, L ] f32    embedding folded through W1:  W1_e @ emb.T
    w2_ref    [H1, H0] cdt
    w3_ref    [1,  H1] cdt
    b3_ref    [1,  1 ] f32    final bias (SMEM scalar)
    o_ref     [1,  TB] f32    output, batch on the lane axis (lane-dense)
    """
    cdt = x_ref.dtype
    tb = x_ref.shape[1]
    n_label = w1emb_ref.shape[1]

    # Layer 1: weight as MXU LHS -> batch fills the N / lane axis.
    h1 = jnp.dot(w1x_ref[...], x_ref[...],
                 preferred_element_type=jnp.float32)              # [H0, TB] f32

    # Embedding contribution (folded offline into W1).
    yv = y_ref[...]                                               # [1, TB] i32
    w1e = w1emb_ref[...]                                          # [H0, L] f32
    if n_label <= 16:
        # Small label count: per-label broadcast-select-add on the VPU
        # (MXU-push slot stays free; no [L, TB] one-hot materialized).
        for l in range(n_label):
            sel = (yv == l).astype(jnp.float32)                   # [1, TB]
            h1 = h1 + sel * w1e[:, l:l + 1]                       # outer-prod add
    else:
        # Large label count: one-hot matmul on the MXU.
        lbl = jax.lax.broadcasted_iota(jnp.int32, (n_label, tb), 0)
        onehot = (yv == lbl).astype(cdt)                          # [L, TB]
        h1 = h1 + jnp.dot(w1e.astype(cdt), onehot,
                          preferred_element_type=jnp.float32)
    h1 = jnp.where(h1 > 0, h1, 0.2 * h1)          # LeakyReLU(0.2), f32 (v5e-safe)

    # Layer 2
    h2 = jnp.dot(w2_ref[...], h1.astype(cdt),
                 preferred_element_type=jnp.float32)              # [H1, TB]
    h2 = jnp.where(h2 > 0, h2, 0.2 * h2)

    # Final layer: [1, H1] @ [H1, TB] -> [1, TB]; lane-dense, no transpose.
    out = jnp.dot(w3_ref[...], h2.astype(cdt),
                  preferred_element_type=jnp.float32)
    o_ref[...] = (out + b3_ref[0, 0]).astype(o_ref.dtype)


def _pick_block_b(B, cap=4096):
    """Batch tile: full batch for small/ragged B, else >=2 lane-aligned steps."""
    if B < 256 or B % 128 != 0:
        return B                     # one full-extent tile (always legal blocks)
    bb = min(cap, B // 2)            # >=2 grid steps -> both v7x TensorCores
    bb = (bb // 128) * 128
    while B % bb != 0:               # terminates at 128 since B % 128 == 0
        bb -= 128
    return bb


def critic_forward(x_t, y_row, w1x, w1emb, w2, w3, b3, *, block_b=None):
    """x_t: [I, B] cdt (feature-major), y_row: [1, B] int32.  Returns [B, 1] f32."""
    I, B = x_t.shape
    H0, L = w1emb.shape
    H1 = w2.shape[0]

    if block_b is None:
        block_b = _pick_block_b(B)
    # TODO(synk): pad ragged batches instead of asserting.
    assert B % block_b == 0, "batch must be a multiple of the batch tile"
    if B // block_b > 1:
        assert block_b % 128 == 0, "multi-step batch tile must be 128-aligned"

    def const(shape):
        return pl.BlockSpec(shape, lambda i: (0, 0))   # resident across grid

    idt = x_t.dtype.itemsize
    flops = 2 * B * (I * H0 + H0 * H1 + H1) + B * L * H0
    bytes_accessed = (B * (I * idt + 4 + 4)                 # x + y + out
                      + (I * H0 + H0 * H1 + H1) * idt       # weights
                      + H0 * L * 4)                         # folded emb (f32)

    out = pl.pallas_call(
        _critic_kernel,
        out_shape=jax.ShapeDtypeStruct((1, B), jnp.float32),
        grid=(B // block_b,),
        in_specs=[
            pl.BlockSpec((1, block_b), lambda i: (0, i)),        # y (lanes)
            pl.BlockSpec((I, block_b), lambda i: (0, i)),        # x (feature-major)
            const((H0, I)),                                      # W1 x-slice
            const((H0, L)),                                      # emb folded thru W1
            const((H1, H0)),                                     # W2
            const((1, H1)),                                      # W3
            pl.BlockSpec(memory_space=pltpu.MemorySpace.SMEM),   # b3 scalar
        ],
        out_specs=pl.BlockSpec((1, block_b), lambda i: (0, i)),
        compiler_params=pltpu.CompilerParams(
            dimension_semantics=("parallel",)),
        cost_estimate=pl.CostEstimate(flops=flops, transcendentals=0,
                                      bytes_accessed=bytes_accessed),
    )(y_row, x_t, w1x, w1emb, w2, w3, b3)
    return out.reshape(B, 1)


# ------------------------------ glue (JAX) -----------------------------------
def spectral_normalize(w, key, n_iters=50, eps=1e-12):
    """W / sigma_max(W) via power iteration (random u init, fori_loop)."""
    u = jax.random.normal(key, (w.shape[0],), w.dtype)
    u = u / (jnp.linalg.norm(u) + eps)

    def body(_, u):
        v = w.T @ u
        v = v / (jnp.linalg.norm(v) + eps)
        u = w @ v
        return u / (jnp.linalg.norm(u) + eps)

    u = jax.lax.fori_loop(0, n_iters, body, u)
    v = w.T @ u
    v = v / (jnp.linalg.norm(v) + eps)
    sigma = u @ (w @ v)
    return w / sigma


def init_params(key, input_dim, hidden, embedding, label, dtype=jnp.float32):
    k_emb, k1, k2, k3, kb3, ku1, ku2, ku3 = jax.random.split(key, 8)
    embed_tbl = jax.random.normal(k_emb, (label, embedding), dtype)  # nn.Embedding: N(0,1)

    def linear_w(k, out_f, in_f):
        bound = 1.0 / jnp.sqrt(in_f)
        return jax.random.uniform(k, (out_f, in_f), dtype, -bound, bound)

    w1 = spectral_normalize(linear_w(k1, hidden[0], input_dim + embedding), ku1)  # [H0, I+E]
    w2 = spectral_normalize(linear_w(k2, hidden[1], hidden[0]), ku2)              # [H1, H0]
    w3 = spectral_normalize(linear_w(k3, 1, hidden[1]), ku3)                      # [1, H1]
    b3 = jax.random.uniform(kb3, (1,), dtype,
                            -1.0 / jnp.sqrt(hidden[1]), 1.0 / jnp.sqrt(hidden[1]))

    w1x = w1[:, :input_dim]                         # [H0, I]
    w1emb = w1[:, input_dim:] @ embed_tbl.T         # [H0, L] embedding folded thru W1
    return w1x, w1emb, w2, w3, b3.reshape(1, 1)


def critic_apply(params, x, y, compute_dtype=jnp.bfloat16):
    w1x, w1emb, w2, w3, b3 = params
    cdt = compute_dtype
    x_t = x.T.astype(cdt)                       # [I, B] feature-major, batch on lanes
    y_row = y.astype(jnp.int32).reshape(1, -1)  # [1, B] labels on lanes
    return critic_forward(
        x_t, y_row,
        w1x.astype(cdt), w1emb.astype(jnp.float32),
        w2.astype(cdt), w3.astype(cdt),
        b3.astype(jnp.float32))


# --------------------------------- main --------------------------------------
if __name__ == "__main__":
    INPUT, HIDDEN, EMBEDDING, LABEL = 16, (32, 16), 8, 4
    B = 8

    key = jax.random.PRNGKey(0)
    k_params, k_x, k_y = jax.random.split(key, 3)

    params = init_params(k_params, INPUT, HIDDEN, EMBEDDING, LABEL)
    x = jax.random.normal(k_x, (B, INPUT), jnp.float32)
    y = jax.random.randint(k_y, (B,), 0, LABEL, jnp.int32)

    out = jax.block_until_ready(critic_apply(params, x, y))
    assert out.shape == (B, 1), out.shape

    # Pure-JAX reference mirroring the kernel numerics (bf16 MXU operands,
    # f32 accumulation, f32 folded-embedding add).
    w1x, w1emb, w2, w3, b3 = params
    as_f32 = lambda a: a.astype(jnp.bfloat16).astype(jnp.float32)
    hp = jax.lax.Precision.HIGHEST
    leaky = lambda t: jnp.where(t > 0, t, 0.2 * t)

    h1 = jnp.dot(as_f32(w1x), as_f32(x).T, precision=hp)          # [H0, B]
    h1 = h1 + w1emb.astype(jnp.float32)[:, y]                     # column gather
    h1 = leaky(h1)
    h2 = leaky(jnp.dot(as_f32(w2), as_f32(h1), precision=hp))     # [H1, B]
    ref = (jnp.dot(as_f32(w3), as_f32(h2), precision=hp) + b3[0, 0]).T  # [B, 1]

    max_err = float(jnp.max(jnp.abs(out - ref)))
    assert jnp.allclose(out, ref, atol=5e-3, rtol=5e-3), max_err

    print("KERNEL_OK")
</pallas_src>

<mosaic_0001>
module attributes {stable_mosaic.version = 11 : i64} {
  func.func @_critic_kernel(%arg0: i32, %arg1: memref<1x8xi32, #tpu.memory_space<vmem>>, %arg2: memref<16x8xbf16, #tpu.memory_space<vmem>>, %arg3: memref<32x16xbf16, #tpu.memory_space<vmem>>, %arg4: memref<32x4xf32, #tpu.memory_space<vmem>>, %arg5: memref<16x32xbf16, #tpu.memory_space<vmem>>, %arg6: memref<1x16xbf16, #tpu.memory_space<vmem>>, %arg7: memref<1x1xf32, #tpu.memory_space<smem>>, %arg8: memref<1x8xf32, #tpu.memory_space<vmem>>) attributes {dimension_semantics = [#tpu.dimension_semantics<parallel>], iteration_bounds = array<i64: 1>, scalar_prefetch = 0 : i64, scratch_operands = 0 : i64, tpu.core_type = #tpu.core_type<tc>, window_params = [{transform_indices = @transform_0, window_bounds = array<i64: 1, 8>}, {transform_indices = @transform_1, window_bounds = array<i64: 16, 8>}, {pipeline_mode = #tpu.pipeline_mode<synchronous>, transform_indices = @transform_2, window_bounds = array<i64: 32, 16>}, {pipeline_mode = #tpu.pipeline_mode<synchronous>, transform_indices = @transform_3, window_bounds = array<i64: 32, 4>}, {pipeline_mode = #tpu.pipeline_mode<synchronous>, transform_indices = @transform_4, window_bounds = array<i64: 16, 32>}, {pipeline_mode = #tpu.pipeline_mode<synchronous>, transform_indices = @transform_5, window_bounds = array<i64: 1, 16>}, {transform_indices = @transform_6, window_bounds = array<i64: 1, 1>}, {transform_indices = @transform_7, window_bounds = array<i64: 1, 8>}]} {
    %c0 = arith.constant 0 : index
    %c0_0 = arith.constant 0 : index
    %0 = vector.load %arg3[%c0, %c0_0] : memref<32x16xbf16, #tpu.memory_space<vmem>>, vector<32x16xbf16>
    %c0_1 = arith.constant 0 : index
    %c0_2 = arith.constant 0 : index
    %1 = vector.load %arg2[%c0_1, %c0_2] : memref<16x8xbf16, #tpu.memory_space<vmem>>, vector<16x8xbf16>
    %cst = arith.constant dense<0.000000e+00> : vector<32x8xf32>
    %2 = tpu.matmul %0, %1, %cst {dimension_numbers = #tpu.dot_dimension_numbers<[1], [0], [0], [1], [0, 0, 1, 1], [], []>} : vector<32x16xbf16>, vector<16x8xbf16>, vector<32x8xf32> -> vector<32x8xf32>
    %c0_3 = arith.constant 0 : index
    %c0_4 = arith.constant 0 : index
    %3 = vector.load %arg1[%c0_3, %c0_4] : memref<1x8xi32, #tpu.memory_space<vmem>>, vector<1x8xi32>
    %c0_5 = arith.constant 0 : index
    %c0_6 = arith.constant 0 : index
    %4 = vector.load %arg4[%c0_5, %c0_6] : memref<32x4xf32, #tpu.memory_space<vmem>>, vector<32x4xf32>
    %c0_i32 = arith.constant 0 : i32
    %5 = vector.broadcast %c0_i32 : i32 to vector<1x8xi32>
    %6 = arith.cmpi eq, %3, %5 : vector<1x8xi32>
    %7 = arith.extui %6 : vector<1x8xi1> to vector<1x8xi32>
    %8 = arith.sitofp %7 : vector<1x8xi32> to vector<1x8xf32>
    %9 = vector.extract_strided_slice %4 {offsets = [0, 0], sizes = [32, 1], strides = [1, 1]} : vector<32x4xf32> to vector<32x1xf32>
    %10 = vector.broadcast %8 : vector<1x8xf32> to vector<32x8xf32>
    %11 = vector.broadcast %9 : vector<32x1xf32> to vector<32x8xf32>
    %12 = arith.mulf %10, %11 : vector<32x8xf32>
    %13 = arith.addf %2, %12 : vector<32x8xf32>
    %c1_i32 = arith.constant 1 : i32
    %14 = vector.broadcast %c1_i32 : i32 to vector<1x8xi32>
    %15 = arith.cmpi eq, %3, %14 : vector<1x8xi32>
    %16 = arith.extui %15 : vector<1x8xi1> to vector<1x8xi32>
    %17 = arith.sitofp %16 : vector<1x8xi32> to vector<1x8xf32>
    %18 = vector.extract_strided_slice %4 {offsets = [0, 1], sizes = [32, 1], strides = [1, 1]} : vector<32x4xf32> to vector<32x1xf32>
    %19 = vector.broadcast %17 : vector<1x8xf32> to vector<32x8xf32>
    %20 = vector.broadcast %18 : vector<32x1xf32> to vector<32x8xf32>
    %21 = arith.mulf %19, %20 : vector<32x8xf32>
    %22 = arith.addf %13, %21 : vector<32x8xf32>
    %c2_i32 = arith.constant 2 : i32
    %23 = vector.broadcast %c2_i32 : i32 to vector<1x8xi32>
    %24 = arith.cmpi eq, %3, %23 : vector<1x8xi32>
    %25 = arith.extui %24 : vector<1x8xi1> to vector<1x8xi32>
    %26 = arith.sitofp %25 : vector<1x8xi32> to vector<1x8xf32>
    %27 = vector.extract_strided_slice %4 {offsets = [0, 2], sizes = [32, 1], strides = [1, 1]} : vector<32x4xf32> to vector<32x1xf32>
    %28 = vector.broadcast %26 : vector<1x8xf32> to vector<32x8xf32>
    %29 = vector.broadcast %27 : vector<32x1xf32> to vector<32x8xf32>
    %30 = arith.mulf %28, %29 : vector<32x8xf32>
    %31 = arith.addf %22, %30 : vector<32x8xf32>
    %c3_i32 = arith.constant 3 : i32
    %32 = vector.broadcast %c3_i32 : i32 to vector<1x8xi32>
    %33 = arith.cmpi eq, %3, %32 : vector<1x8xi32>
    %34 = arith.extui %33 : vector<1x8xi1> to vector<1x8xi32>
    %35 = arith.sitofp %34 : vector<1x8xi32> to vector<1x8xf32>
    %36 = vector.extract_strided_slice %4 {offsets = [0, 3], sizes = [32, 1], strides = [1, 1]} : vector<32x4xf32> to vector<32x1xf32>
    %37 = vector.broadcast %35 : vector<1x8xf32> to vector<32x8xf32>
    %38 = vector.broadcast %36 : vector<32x1xf32> to vector<32x8xf32>
    %39 = arith.mulf %37, %38 : vector<32x8xf32>
    %40 = arith.addf %31, %39 : vector<32x8xf32>
    %cst_7 = arith.constant 0.000000e+00 : f32
    %41 = vector.broadcast %cst_7 : f32 to vector<32x8xf32>
    %42 = arith.cmpf ogt, %40, %41 : vector<32x8xf32>
    %cst_8 = arith.constant 2.000000e-01 : f32
    %43 = vector.broadcast %cst_8 : f32 to vector<32x8xf32>
    %44 = arith.mulf %43, %40 : vector<32x8xf32>
    %45 = arith.select %42, %40, %44 : vector<32x8xi1>, vector<32x8xf32>
    %c0_9 = arith.constant 0 : index
    %c0_10 = arith.constant 0 : index
    %46 = vector.load %arg5[%c0_9, %c0_10] : memref<16x32xbf16, #tpu.memory_space<vmem>>, vector<16x32xbf16>
    %47 = arith.truncf %45 : vector<32x8xf32> to vector<32x8xbf16>
    %cst_11 = arith.constant dense<0.000000e+00> : vector<16x8xf32>
    %48 = tpu.matmul %46, %47, %cst_11 {dimension_numbers = #tpu.dot_dimension_numbers<[1], [0], [0], [1], [0, 0, 1, 1], [], []>} : vector<16x32xbf16>, vector<32x8xbf16>, vector<16x8xf32> -> vector<16x8xf32>
    %cst_12 = arith.constant 0.000000e+00 : f32
    %49 = vector.broadcast %cst_12 : f32 to vector<16x8xf32>
    %50 = arith.cmpf ogt, %48, %49 : vector<16x8xf32>
    %cst_13 = arith.constant 2.000000e-01 : f32
    %51 = vector.broadcast %cst_13 : f32 to vector<16x8xf32>
    %52 = arith.mulf %51, %48 : vector<16x8xf32>
    %53 = arith.select %50, %48, %52 : vector<16x8xi1>, vector<16x8xf32>
    %c0_14 = arith.constant 0 : index
    %c0_15 = arith.constant 0 : index
    %54 = vector.load %arg6[%c0_14, %c0_15] : memref<1x16xbf16, #tpu.memory_space<vmem>>, vector<1x16xbf16>
    %55 = arith.truncf %53 : vector<16x8xf32> to vector<16x8xbf16>
    %cst_16 = arith.constant dense<0.000000e+00> : vector<1x8xf32>
    %56 = tpu.matmul %54, %55, %cst_16 {dimension_numbers = #tpu.dot_dimension_numbers<[1], [0], [0], [1], [0, 0, 1, 1], [], []>} : vector<1x16xbf16>, vector<16x8xbf16>, vector<1x8xf32> -> vector<1x8xf32>
    %c0_17 = arith.constant 0 : index
    %c0_18 = arith.constant 0 : index
    %57 = memref.load %arg7[%c0_17, %c0_18] : memref<1x1xf32, #tpu.memory_space<smem>>
    %58 = vector.broadcast %57 : f32 to vector<1x8xf32>
    %59 = arith.addf %56, %58 : vector<1x8xf32>
    %c0_19 = arith.constant 0 : index
    %c0_20 = arith.constant 0 : index
    %60 = vector.load %arg8[%c0_19, %c0_20] : memref<1x8xf32, #tpu.memory_space<vmem>>, vector<1x8xf32>
    tpu.vector_store %arg8[%c0_19, %c0_20], %59 {strides = array<i32>} : memref<1x8xf32, #tpu.memory_space<vmem>>, vector<1x8xf32>,
    return
  }
  func.func @transform_0(%arg0: i32) -> (i32, i32) {
    %c0_i32 = arith.constant 0 : i32
    %c0_i32_0 = arith.constant 0 : i32
    return %c0_i32, %arg0 : i32, i32
  }
  func.func @transform_1(%arg0: i32) -> (i32, i32) {
    %c0_i32 = arith.constant 0 : i32
    %c0_i32_0 = arith.constant 0 : i32
    return %c0_i32, %arg0 : i32, i32
  }
  func.func @transform_2(%arg0: i32) -> (i32, i32) {
    %c0_i32 = arith.constant 0 : i32
    %c0_i32_0 = arith.constant 0 : i32
    %c0_i32_1 = arith.constant 0 : i32
    return %c0_i32, %c0_i32_0 : i32, i32
  }
  func.func @transform_3(%arg0: i32) -> (i32, i32) {
    %c0_i32 = arith.constant 0 : i32
    %c0_i32_0 = arith.constant 0 : i32
    %c0_i32_1 = arith.constant 0 : i32
    return %c0_i32, %c0_i32_0 : i32, i32
  }
  func.func @transform_4(%arg0: i32) -> (i32, i32) {
    %c0_i32 = arith.constant 0 : i32
    %c0_i32_0 = arith.constant 0 : i32
    %c0_i32_1 = arith.constant 0 : i32
    return %c0_i32, %c0_i32_0 : i32, i32
  }
  func.func @transform_5(%arg0: i32) -> (i32, i32) {
    %c0_i32 = arith.constant 0 : i32
    %c0_i32_0 = arith.constant 0 : i32
    %c0_i32_1 = arith.constant 0 : i32
    return %c0_i32, %c0_i32_0 : i32, i32
  }
  func.func @transform_6(%arg0: i32) -> (i32, i32) {
    %c0_i32 = arith.constant 0 : i32
    %c0_i32_0 = arith.constant 0 : i32
    %c0_i32_1 = arith.constant 0 : i32
    return %c0_i32, %c0_i32_0 : i32, i32
  }
  func.func @transform_7(%arg0: i32) -> (i32, i32) {
    %c0_i32 = arith.constant 0 : i32
    %c0_i32_0 = arith.constant 0 : i32
    return %c0_i32, %arg0 : i32, i32
  }
}

</mosaic_0001>

<llo_original>
// kernel: tpu_custom_call.1
$region0: #{tpu_custom_call.1}
  #allocation0 [shape = 'u32[]', space=smem, size = 0x4, offset = 0x4, fixed_abs, tag = 'smem constant byte address 0x4 - core index']
  #allocation1 [shape = 'u32[144,128]{1,0:T(1,128)}', space=vmem, size = 0x12000, scoped, tag = 'internal scratch']
  #allocation2 [shape = 'f32[1,1]{1,0:T(1,128)S(6)}', space=smem, size = 0x200, scoped, tag = 'scoped memory for tpu_custom_call.1']
  %s0 = inlined_call_operand.vmem [shape: s32[1,8], index: 0, kind: input, shape index: {}]
  %s1 = inlined_call_operand.vmem [shape: bf16[16,8], index: 1, kind: input, shape index: {}]
  %s2 = inlined_call_operand.vmem [shape: bf16[32,16], index: 2, kind: input, shape index: {}]
  %s3 = inlined_call_operand.vmem [shape: f32[32,4], index: 3, kind: input, shape index: {}]
  %s4 = inlined_call_operand.vmem [shape: bf16[16,32], index: 4, kind: input, shape index: {}]
  %s5 = inlined_call_operand.vmem [shape: bf16[1,16], index: 5, kind: input, shape index: {}]
  %s6 = inlined_call_operand.<no memory space> [shape: f32[1,1], index: 6, kind: input, shape index: {}]
  %s7 = inlined_call_operand.hbm [shape: f32[1,8], index: 7, kind: output, shape index: {}]
  %s8 = sld [smem:[#allocation0]]
  $region38: #{tpu_custom_call.1} parent=0
    _
  %s10 = ssub.s32 1, %s8
  %s11 = scalar_select 0, %s10, %s8
  %12 = sst [smem:[#allocation2]] %s6
  $region1: #{tpu_custom_call.1} parent=0
    #allocation3 [shape = 'u8[512]{0}', space=vmem, size = 0x400, scoped, tag = 'output window, operand 0, single buffered']
    #allocation4 [shape = 's32[1]{0}', space=sflag, size = 0x4, scoped, tag = 'scoped memory for tpu_custom_call.1']
    %13 = vsyncpa [#allocation4], 0
    // Predicated region
    $region2: #{tpu_custom_call.1} parent=1 // pred_check
      _
    $region3: #{tpu_custom_call.1} parent=1 // pred_check_branch
      %15 = sbr.rel (0) target = $region5
    $region4: #{tpu_custom_call.1} parent=1 // pred_region
      _
    $region5: #{tpu_custom_call.1} parent=1 // pred_fallthru
      _
    // Predicated region
    $region6: #{tpu_custom_call.1} parent=1 // pred_check
      _
    $region7: #{tpu_custom_call.1} parent=1 // pred_check_branch
      %17 = sbr.rel (0) target = $region9
    $region8: #{tpu_custom_call.1} parent=1 // pred_region
      _
    $region9: #{tpu_custom_call.1} parent=1 // pred_fallthru
      _
    // Predicated region
    $region10: #{tpu_custom_call.1} parent=1 // pred_check
      _
    $region11: #{tpu_custom_call.1} parent=1 // pred_check_branch
      %19 = sbr.rel (0) target = $region13
    $region12: #{tpu_custom_call.1} parent=1 // pred_region
      _
    $region13: #{tpu_custom_call.1} parent=1 // pred_fallthru
      _
    // Predicated region
    $region14: #{tpu_custom_call.1} parent=1 // pred_check
      _
    $region15: #{tpu_custom_call.1} parent=1 // pred_check_branch
      %21 = sbr.rel (0) target = $region17
    $region16: #{tpu_custom_call.1} parent=1 // pred_region
      _
    $region17: #{tpu_custom_call.1} parent=1 // pred_fallthru
      _
    // Predicated region
    $region18: #{tpu_custom_call.1} parent=1 // pred_check
      _
    $region19: #{tpu_custom_call.1} parent=1 // pred_check_branch
      %23 = sbr.rel (0) target = $region21
    $region20: #{tpu_custom_call.1} parent=1 // pred_region
      _
    $region21: #{tpu_custom_call.1} parent=1 // pred_fallthru
      _
    // Predicated region
    $region22: #{tpu_custom_call.1} parent=1 // pred_check
      _
    $region23: #{tpu_custom_call.1} parent=1 // pred_check_branch
      %25 = sbr.rel (0) target = $region25
    $region24: #{tpu_custom_call.1} parent=1 // pred_region
      _
    $region25: #{tpu_custom_call.1} parent=1 // pred_fallthru
      _
    // Predicated region
    $region26: #{tpu_custom_call.1} parent=1 // pred_check
      _
    $region27: #{tpu_custom_call.1} parent=1 // pred_check_branch
      %27 = sbr.rel (0) target = $region29
    $region28: #{tpu_custom_call.1} parent=1 // pred_region
      _
    $region29: #{tpu_custom_call.1} parent=1 // pred_fallthru
      _
    %v29 = vld [vmem:[%s2] sm:$0xf]
    %v30 = vld [vmem:[%s2 + $0x4] sm:$0xf]
    %v31 = vld [vmem:[%s2 + $0x8] sm:$0xf]
    %v32 = vld [vmem:[%s2 + $0xc] sm:$0xf]
    %v33 = vld [vmem:[%s1] sm:$0xf]
    %v34 = vld [vmem:[%s1 + $0x4] sm:$0xf]
    %v35 = vld [vmem:[%s0] sm:$0x1]
    %v36 = vld [vmem:[%s3] sm:$0xff]
    %v37 = vld [vmem:[%s3 + $0x8] sm:$0xff]
    %v38 = vld [vmem:[%s3 + $0x10] sm:$0xff]
    %v39 = vld [vmem:[%s3 + $0x18] sm:$0xff]
    %vm40 = vcmp.eq.s32.totalorder %v35, 0
    %v41 = vsel %vm40, 1, 0
    %v42 = vcvt.s32.f32 %v41
    %v44 = vlaneseq
    %v45 = vshrl.u32 %v44, 7
    %v46 = vsub.s32 0, %v45
    %v47 = vrot.slane %v42, %v46
    %50 = vset.pattern.permute.xlu0 0
    %51 = vperm.xlu0 %50, %v36
    %v52 = vpop.permute.xlu0 %51
    %55 = vset.pattern.permute.xlu0 0
    %56 = vperm.xlu0 %55, %v37
    %v57 = vpop.permute.xlu0 %56
    %60 = vset.pattern.permute.xlu0 0
    %61 = vperm.xlu0 %60, %v38
    %v62 = vpop.permute.xlu0 %61
    %65 = vset.pattern.permute.xlu0 0
    %66 = vperm.xlu0 %65, %v39
    %v67 = vpop.permute.xlu0 %66
    %v69 = vmul.f32 %v47, %v52
    %v70 = vmul.f32 %v47, %v57
    %v71 = vmul.f32 %v47, %v62
    %v72 = vmul.f32 %v47, %v67
    %v77 = vunpack.c.l.b16 %v29
    %v78 = vunpack.c.l.b16 %v30
    %v79 = vunpack.c.l.b16 %v31
    %v80 = vunpack.c.l.b16 %v32
    %v81 = vpack.c.b16 %v78, %v77
    %v82 = vpack.c.b16 %v80, %v79
    %v85 = vunpack.c.l.b16 %v33
    %v86 = vunpack.c.l.b16 %v34
    %v87 = vpack.c.b16 %v86, %v85
    %vm89 = vcmask 130048
    %v91 = vsel %vm89, %v81, 0
    %v94 = vsel %vm89, %v82, 0
    %96 = vmatprep.subr.bf16.mxu0 0
    %97 = vmatpush1.bf16.msra.mxu0 0
    %98 = vmatprep.subr.bf16.mxu0 0
    %99 = vmatpush1.bf16.msra.mxu0 0
    %100 = vmatprep.subr.bf16.mxu0 0
    %101 = vmatpush1.bf16.msra.mxu0 0
    %102 = vmatprep.subr.bf16.mxu0 0
    %103 = vmatpush1.bf16.msra.mxu0 0
    %104 = vmatprep.subr.bf16.mxu0 0
    %105 = vmatpush1.bf16.msra.mxu0 0
    %106 = vmatprep.subr.bf16.mxu0 0
    %107 = vmatpush1.bf16.msra.mxu0 0
    %108 = vmatprep.subr.bf16.mxu0 0
    %109 = vmatpush1.bf16.msra.mxu0 0
    %110 = vmatprep.subr.bf16.mxu0 0
    %111 = vmatpush1.bf16.msra.mxu0 %v87
    %112 = vmatprep.subr.bf16.mxu0 0
    %113 = vmatpush2.bf16.msra.mxu0 0
    %114 = vmatprep.subr.bf16.mxu0 0
    %115 = vmatpush2.bf16.msra.mxu0 0
    %116 = vmatprep.subr.bf16.mxu0 0
    %117 = vmatpush2.bf16.msra.mxu0 0
    %118 = vmatprep.subr.bf16.mxu0 0
    %119 = vmatpush2.bf16.msra.mxu0 0
    %120 = vmatprep.subr.bf16.mxu0 0
    %121 = vmatpush2.bf16.msra.mxu0 0
    %122 = vmatprep.subr.bf16.mxu0 0
    %123 = vmatpush2.bf16.msra.mxu0 0
    %124 = vmatprep.subr.bf16.mxu0 0
    %125 = vmatpush2.bf16.msra.mxu0 0
    %126 = vmatprep.subr.bf16.mxu0 0
    %127 = vmatpush2.bf16.msra.mxu0 0
    %128 = vmatprep.mubr.bf16.mxu0 0
    %129 = vmatmul.mubr.bf16.gmra.mxu0 %v91
    %v130 = vpop.f32.mrf.mxu0
    %v131 = vadd.f32 %v69, %v130
    %v132 = vpop.f32.mrf.mxu0
    %v133 = vpop.f32.mrf.mxu0
    %v134 = vadd.f32 %v70, %v133
    %v135 = vpop.f32.mrf.mxu0
    %136 = vmatprep.mubr.bf16.mxu0 0
    %137 = vmatmul.mubr.bf16.gmra.mxu0 %v94
    %v138 = vpop.f32.mrf.mxu0
    %v139 = vadd.f32 %v71, %v138
    %v140 = vpop.f32.mrf.mxu0
    %v141 = vpop.f32.mrf.mxu0
    %v142 = vadd.f32 %v72, %v141
    %v143 = vpop.f32.mrf.mxu0
    %144 = vdwg.mxu0
    %vm145 = vcmp.eq.s32.totalorder %v35, 1
    %v146 = vsel %vm145, 1, 0
    %v147 = vcvt.s32.f32 %v146
    %v149 = vlaneseq
    %v150 = vshrl.u32 %v149, 7
    %v151 = vsub.s32 0, %v150
    %v152 = vrot.slane %v147, %v151
    %154 = vset.pattern.permute.xlu0 1
    %155 = vperm.xlu0 %154, %v36
    %v156 = vpop.permute.xlu0 %155
    %158 = vset.pattern.permute.xlu0 1
    %159 = vperm.xlu0 %158, %v37
    %v160 = vpop.permute.xlu0 %159
    %162 = vset.pattern.permute.xlu0 1
    %163 = vperm.xlu0 %162, %v38
    %v164 = vpop.permute.xlu0 %163
    %166 = vset.pattern.permute.xlu0 1
    %167 = vperm.xlu0 %166, %v39
    %v168 = vpop.permute.xlu0 %167
    %v170 = vmul.f32 %v152, %v156
    %v171 = vmul.f32 %v152, %v160
    %v172 = vmul.f32 %v152, %v164
    %v173 = vmul.f32 %v152, %v168
    %v174 = vadd.f32 %v131, %v170
    %v175 = vadd.f32 %v134, %v171
    %v176 = vadd.f32 %v139, %v172
    %v177 = vadd.f32 %v142, %v173
    %vm178 = vcmp.eq.s32.totalorder %v35, 2
    %v179 = vsel %vm178, 1, 0
    %v180 = vcvt.s32.f32 %v179
    %v182 = vlaneseq
    %v183 = vshrl.u32 %v182, 7
    %v184 = vsub.s32 0, %v183
    %v185 = vrot.slane %v180, %v184
    %187 = vset.pattern.permute.xlu0 2
    %188 = vperm.xlu0 %187, %v36
    %v189 = vpop.permute.xlu0 %188
    %191 = vset.pattern.permute.xlu0 2
    %192 = vperm.xlu0 %191, %v37
    %v193 = vpop.permute.xlu0 %192
    %195 = vset.pattern.permute.xlu0 2
    %196 = vperm.xlu0 %195, %v38
    %v197 = vpop.permute.xlu0 %196
    %199 = vset.pattern.permute.xlu0 2
    %200 = vperm.xlu0 %199, %v39
    %v201 = vpop.permute.xlu0 %200
    %v203 = vmul.f32 %v185, %v189
    %v204 = vmul.f32 %v185, %v193
    %v205 = vmul.f32 %v185, %v197
    %v206 = vmul.f32 %v185, %v201
    %v207 = vadd.f32 %v174, %v203
    %v208 = vadd.f32 %v175, %v204
    %v209 = vadd.f32 %v176, %v205
    %v210 = vadd.f32 %v177, %v206
    %vm211 = vcmp.eq.s32.totalorder %v35, 3
    %v212 = vsel %vm211, 1, 0
    %v213 = vcvt.s32.f32 %v212
    %v215 = vlaneseq
    %v216 = vshrl.u32 %v215, 7
    %v217 = vsub.s32 0, %v216
    %v218 = vrot.slane %v213, %v217
    %220 = vset.pattern.permute.xlu0 3
    %221 = vperm.xlu0 %220, %v36
    %v222 = vpop.permute.xlu0 %221
    %224 = vset.pattern.permute.xlu0 3
    %225 = vperm.xlu0 %224, %v37
    %v226 = vpop.permute.xlu0 %225
    %228 = vset.pattern.permute.xlu0 3
    %229 = vperm.xlu0 %228, %v38
    %v230 = vpop.permute.xlu0 %229
    %232 = vset.pattern.permute.xlu0 3
    %233 = vperm.xlu0 %232, %v39
    %v234 = vpop.permute.xlu0 %233
    %v236 = vmul.f32 %v218, %v222
    %v237 = vmul.f32 %v218, %v226
    %v238 = vmul.f32 %v218, %v230
    %v239 = vmul.f32 %v218, %v234
    %v240 = vadd.f32 %v207, %v236
    %v241 = vadd.f32 %v208, %v237
    %v242 = vadd.f32 %v209, %v238
    %v243 = vadd.f32 %v210, %v239
    %vm244 = vcmp.gt.f32.partialorder %v240, 0.0
    %vm245 = vcmp.gt.f32.partialorder %v241, 0.0
    %vm246 = vcmp.gt.f32.partialorder %v242, 0.0
    %vm247 = vcmp.gt.f32.partialorder %v243, 0.0
    %v248 = vmul.f32 %v240, 0.2
    %v249 = vmul.f32 %v241, 0.2
    %v250 = vmul.f32 %v242, 0.2
    %v251 = vmul.f32 %v243, 0.2
    %v252 = vsel %vm244, %v240, %v248
    %v253 = vsel %vm245, %v241, %v249
    %v254 = vsel %vm246, %v242, %v250
    %v255 = vsel %vm247, %v243, %v251
    %v256 = vld [vmem:[%s4] sm:$0xf]
    %v257 = vld [vmem:[%s4 + $0x4] sm:$0xf]
    %v258 = vpack.c.bf16 %v253, %v252
    %v259 = vpack.c.bf16 %v255, %v254
    %v262 = vunpack.c.l.b16 %v256
    %v263 = vunpack.c.l.b16 %v257
    %v264 = vpack.c.b16 %v263, %v262
    %vm265 = vcmask 261120
    %v267 = vsel %vm265, %v264, 0
    %269 = vmatprep.subr.bf16.mxu0 0
    %270 = vmatpush1.bf16.msra.mxu0 0
    %271 = vmatprep.subr.bf16.mxu0 0
    %272 = vmatpush1.bf16.msra.mxu0 0
    %273 = vmatprep.subr.bf16.mxu0 0
    %274 = vmatpush1.bf16.msra.mxu0 0
    %275 = vmatprep.subr.bf16.mxu0 0
    %276 = vmatpush1.bf16.msra.mxu0 0
    %277 = vmatprep.subr.bf16.mxu0 0
    %278 = vmatpush1.bf16.msra.mxu0 0
    %279 = vmatprep.subr.bf16.mxu0 0
    %280 = vmatpush1.bf16.msra.mxu0 0
    %281 = vmatprep.subr.bf16.mxu0 0
    %282 = vmatpush1.bf16.msra.mxu0 %v259
    %283 = vmatprep.subr.bf16.mxu0 0
    %284 = vmatpush1.bf16.msra.mxu0 %v258
    %285 = vmatprep.subr.bf16.mxu0 0
    %286 = vmatpush2.bf16.msra.mxu0 0
    %287 = vmatprep.subr.bf16.mxu0 0
    %288 = vmatpush2.bf16.msra.mxu0 0
    %289 = vmatprep.subr.bf16.mxu0 0
    %290 = vmatpush2.bf16.msra.mxu0 0
    %291 = vmatprep.subr.bf16.mxu0 0
    %292 = vmatpush2.bf16.msra.mxu0 0
    %293 = vmatprep.subr.bf16.mxu0 0
    %294 = vmatpush2.bf16.msra.mxu0 0
    %295 = vmatprep.subr.bf16.mxu0 0
    %296 = vmatpush2.bf16.msra.mxu0 0
    %297 = vmatprep.subr.bf16.mxu0 0
    %298 = vmatpush2.bf16.msra.mxu0 0
    %299 = vmatprep.subr.bf16.mxu0 0
    %300 = vmatpush2.bf16.msra.mxu0 0
    %301 = vmatprep.mubr.bf16.mxu0 0
    %302 = vmatmul.mubr.bf16.gmra.mxu0 %v267
    %v303 = vpop.f32.mrf.mxu0
    %v304 = vadd.f32 0.0, %v303
    %v305 = vpop.f32.mrf.mxu0
    %v306 = vpop.f32.mrf.mxu0
    %v307 = vadd.f32 0.0, %v306
    %v308 = vpop.f32.mrf.mxu0
    %309 = vdwg.mxu0
    %vm310 = vcmp.gt.f32.partialorder %v304, 0.0
    %vm311 = vcmp.gt.f32.partialorder %v307, 0.0
    %v312 = vmul.f32 %v304, 0.2
    %v313 = vmul.f32 %v307, 0.2
    %v314 = vsel %vm310, %v304, %v312
    %v315 = vsel %vm311, %v307, %v313
    %v316 = vld [vmem:[%s5] sm:$0x1]
    %v317 = vpack.c.bf16 %v315, %v314
    %s318 = sld [smem:[#allocation2]]
    %v319 = vstv %s318
    %v321 = vsel %vm89, %v316, 0
    %323 = vmatprep.subr.bf16.mxu0 0
    %324 = vmatpush1.bf16.msra.mxu0 0
    %325 = vmatprep.subr.bf16.mxu0 0
    %326 = vmatpush1.bf16.msra.mxu0 0
    %327 = vmatprep.subr.bf16.mxu0 0
    %328 = vmatpush1.bf16.msra.mxu0 0
    %329 = vmatprep.subr.bf16.mxu0 0
    %330 = vmatpush1.bf16.msra.mxu0 0
    %331 = vmatprep.subr.bf16.mxu0 0
    %332 = vmatpush1.bf16.msra.mxu0 0
    %333 = vmatprep.subr.bf16.mxu0 0
    %334 = vmatpush1.bf16.msra.mxu0 0
    %335 = vmatprep.subr.bf16.mxu0 0
    %336 = vmatpush1.bf16.msra.mxu0 0
    %337 = vmatprep.subr.bf16.mxu0 0
    %338 = vmatpush1.bf16.msra.mxu0 %v317
    %339 = vmatprep.subr.bf16.mxu0 0
    %340 = vmatpush2.bf16.msra.mxu0 0
    %341 = vmatprep.subr.bf16.mxu0 0
    %342 = vmatpush2.bf16.msra.mxu0 0
    %343 = vmatprep.subr.bf16.mxu0 0
    %344 = vmatpush2.bf16.msra.mxu0 0
    %345 = vmatprep.subr.bf16.mxu0 0
    %346 = vmatpush2.bf16.msra.mxu0 0
    %347 = vmatprep.subr.bf16.mxu0 0
    %348 = vmatpush2.bf16.msra.mxu0 0
    %349 = vmatprep.subr.bf16.mxu0 0
    %350 = vmatpush2.bf16.msra.mxu0 0
    %351 = vmatprep.subr.bf16.mxu0 0
    %352 = vmatpush2.bf16.msra.mxu0 0
    %353 = vmatprep.subr.bf16.mxu0 0
    %354 = vmatpush2.bf16.msra.mxu0 0
    %355 = vmatprep.mubr.bf16.mxu0 0
    %356 = vmatmul.mubr.bf16.gmra.mxu0 %v321
    %v357 = vpop.f32.mrf.mxu0
    %v358 = vadd.f32 %v319, %v357
    %v359 = vpop.f32.mrf.mxu0
    %v360 = vpop.f32.mrf.mxu0
    %v361 = vpop.f32.mrf.mxu0
    %362 = vdwg.mxu0
    %vm363 = vcmask 57344
    %364 = vst.msk [vmem:[#allocation3] sm:$0x1] %vm363, %v358
    // Predicated region
    $region30: #{tpu_custom_call.1} parent=1 // pred_check
      _
    $region31: #{tpu_custom_call.1} parent=1 // pred_check_branch
      %366 = sbr.rel (0) target = $region33
    $region32: #{tpu_custom_call.1} parent=1 // pred_region
      %s368 = ssub.s32 16, 16
      %369 = vsyncadd [#allocation4], %s368
      %s371 = sshll.u32 [#allocation3], 4
      %s372 = int_to_ptr.vmem [resolvable:$true] %s371
      %374 = dma.vmem_to_hbm [thread:$0]  %s372, 16, %s7, [#allocation4]
    $region33: #{tpu_custom_call.1} parent=1 // pred_fallthru
      _
    // Predicated region
    $region34: #{tpu_custom_call.1} parent=1 // pred_check
      _
    $region35: #{tpu_custom_call.1} parent=1 // pred_check_branch
      %376 = sbr.rel (0) target = $region37
    $region36: #{tpu_custom_call.1} parent=1 // pred_region
      %377 = dma.done [#allocation4], 16
    $region37: #{tpu_custom_call.1} parent=1 // pred_fallthru
      _
    %378 = vsyncpa [#allocation4], 1

</llo_original>
